<compile_context>
chip_gen: v5e
topology: v5e:2x2
jax: 0.10.0
libtpu: 0.0.40
codegen_flags: <defaults>
</compile_context>

<pallas_src>
import functools

import jax
import jax.numpy as jnp
from jax.experimental import pallas as pl
from jax.experimental.pallas import tpu as pltpu


def _round_up(a: int, b: int) -> int:
    return -(-a // b) * b


def _generator_kernel(x_ref, w_ref, o_ref, m_ref, l_ref, *,
                      tile_vocab: int, vocab_size: int, needs_mask: bool):
    j = pl.program_id(1)
    nv = pl.num_programs(1)

    @pl.when(j == 0)
    def _init():
        m_ref[...] = jnp.full(m_ref.shape, -jnp.inf, dtype=m_ref.dtype)
        l_ref[...] = jnp.zeros(l_ref.shape, dtype=l_ref.dtype)

    # bf16 MXU operands, f32 accumulation.
    logits = jnp.dot(x_ref[...].astype(jnp.bfloat16), w_ref[...],
                     preferred_element_type=jnp.float32)

    if needs_mask:
        # last vocab tile may extend past the true vocab (garbage weight cols):
        # mask them so they never contribute to the row max / sum.
        col = j * tile_vocab + jax.lax.broadcasted_iota(jnp.int32, logits.shape, 1)
        logits = jnp.where(col < vocab_size, logits, -jnp.inf)

    # Online running max / sum(exp) over the vocab axis (f32 scratch).
    m_prev = m_ref[...]
    m_new = jnp.maximum(m_prev, jnp.max(logits, axis=-1, keepdims=True))
    l_ref[...] = (l_ref[...] * jnp.exp(m_prev - m_new)
                  + jnp.sum(jnp.exp(logits - m_new), axis=-1, keepdims=True))
    m_ref[...] = m_new

    # Stash raw logits into the resident output row block.
    start = pl.multiple_of(j * tile_vocab, tile_vocab)
    o_ref[:, pl.ds(start, tile_vocab)] = logits.astype(o_ref.dtype)

    @pl.when(j == nv - 1)
    def _finalize():
        lse = m_ref[...] + jnp.log(l_ref[...])
        o_ref[...] = (o_ref[...].astype(jnp.float32) - lse).astype(o_ref.dtype)


def prepare_generator_weight(weight):
    """nn.Linear weight (V, H) -> pre-transposed bf16 (H, V).

    Call once, outside the jitted hot path (avoids materializing weight.T in
    HBM on every forward and halves weight DMA / VMEM via bf16)."""
    return jnp.asarray(weight).T.astype(jnp.bfloat16)


@functools.partial(jax.jit, static_argnames=("tile_rows", "tile_vocab"))
def generator_forward(x, w_hv, *, tile_rows=256, tile_vocab=512):
    """x: (..., H) float32; w_hv: (H, V) bf16 from prepare_generator_weight.

    Returns (..., V) log-probs in x.dtype."""
    H = x.shape[-1]
    assert w_hv.shape[0] == H, (w_hv.shape, H)
    V = w_hv.shape[1]
    lead = x.shape[:-1]
    x2 = x.reshape(-1, H)
    R = x2.shape[0]

    # Vocab tile: lane-dense multiple of 128.
    tv = min(_round_up(tile_vocab, 128), _round_up(V, 128))
    v_out = _round_up(V, tv)          # padded output width (multiple of tv)
    needs_mask = (v_out != V)

    # Row tile: multiple of 8 (f32 sublane); don't exceed what R needs.
    tm = min(_round_up(tile_rows, 8), _round_up(R, 8))
    # Give the v7x megacore at least two row tiles to shard when possible.
    if R >= 16 and pl.cdiv(R, tm) < 2:
        tm = _round_up(pl.cdiv(R, 2), 8)
    # Keep the resident (tm, v_out) output row block within a VMEM budget that
    # is safe even on v7x (64 MiB physical, double-buffered output).
    out_itemsize = jnp.dtype(x.dtype).itemsize
    while tm > 8 and tm * v_out * out_itemsize > 12 * 1024 * 1024:
        tm = max(8, _round_up(tm // 2, 8))

    grid = (pl.cdiv(R, tm), v_out // tv)

    kernel = functools.partial(_generator_kernel, tile_vocab=tv,
                               vocab_size=V, needs_mask=needs_mask)

    out = pl.pallas_call(
        kernel,
        out_shape=jax.ShapeDtypeStruct((R, v_out), x.dtype),
        grid_spec=pltpu.PrefetchScalarGridSpec(
            num_scalar_prefetch=0,
            grid=grid,
            in_specs=[
                pl.BlockSpec((tm, H), lambda i, j: (i, 0)),    # activations
                pl.BlockSpec((H, tv), lambda i, j: (0, j)),    # streamed weight cols
            ],
            out_specs=pl.BlockSpec((tm, v_out), lambda i, j: (i, 0)),
            scratch_shapes=[
                pltpu.VMEM((tm, 1), jnp.float32),  # running max
                pltpu.VMEM((tm, 1), jnp.float32),  # running sum(exp)
            ],
        ),
        compiler_params=pltpu.CompilerParams(
            dimension_semantics=("parallel", "arbitrary"),
            vmem_limit_bytes=48 * 1024 * 1024,   # > 32 MiB default, safe on v7x
        ),
    )(x2, w_hv)

    if v_out != V:
        out = out[:, :V]
    return out.reshape(*lead, V)


if __name__ == "__main__":
    hidden_size = 128
    vocab_size = 1000   # deliberately not a multiple of the vocab tile
    batch, seq = 2, 8

    key = jax.random.PRNGKey(0)
    kx, kw = jax.random.split(key)
    x = jax.random.normal(kx, (batch, seq, hidden_size), dtype=jnp.float32)
    # deterministic init of the Linear weight (shape (vocab, hidden), no bias)
    weight = jax.random.normal(kw, (vocab_size, hidden_size), dtype=jnp.float32) * 0.02

    w_hv = prepare_generator_weight(weight)   # (H, V) bf16, done once
    out = generator_forward(x, w_hv)
    out = jax.block_until_ready(out)

    # Reference with the same bf16 matmul operands / f32 accumulation.
    logits_ref = jnp.einsum("...h,hv->...v",
                            x.astype(jnp.bfloat16), w_hv,
                            preferred_element_type=jnp.float32)
    ref = jax.nn.log_softmax(logits_ref, axis=-1)

    assert out.shape == (batch, seq, vocab_size), out.shape
    assert bool(jnp.all(jnp.isfinite(out)))
    assert jnp.allclose(out, ref, atol=1e-4, rtol=1e-4), \
        float(jnp.max(jnp.abs(out - ref)))

    print("KERNEL_OK")
</pallas_src>

<mosaic_0001>
module attributes {stable_mosaic.version = 11 : i64} {
  func.func @_generator_kernel(%arg0: i32, %arg1: i32, %arg2: memref<8x128xf32, #tpu.memory_space<vmem>>, %arg3: memref<128x512xbf16, #tpu.memory_space<vmem>>, %arg4: memref<8x1024xf32, #tpu.memory_space<vmem>>, %arg5: memref<8x1xf32, #tpu.memory_space<vmem>>, %arg6: memref<8x1xf32, #tpu.memory_space<vmem>>) attributes {dimension_semantics = [#tpu.dimension_semantics<parallel>, #tpu.dimension_semantics<arbitrary>], iteration_bounds = array<i64: 2, 2>, scalar_prefetch = 0 : i64, scratch_operands = 2 : i64, tpu.core_type = #tpu.core_type<tc>, window_params = [{transform_indices = @transform_0, window_bounds = array<i64: 8, 128>}, {transform_indices = @transform_1, window_bounds = array<i64: 128, 512>}, {transform_indices = @transform_2, window_bounds = array<i64: 8, 1024>}]} {
    %c0_i32 = arith.constant 0 : i32
    %0 = arith.cmpi eq, %arg1, %c0_i32 : i32
    %1 = arith.extui %0 : i1 to i32
    %c0_i32_0 = arith.constant 0 : i32
    %2 = arith.cmpi ne, %1, %c0_i32_0 : i32
    scf.if %2 {
      %cst_18 = arith.constant 0xFF800000 : f32
      %38 = vector.broadcast %cst_18 : f32 to vector<8x1xf32>
      %c0_19 = arith.constant 0 : index
      %c0_20 = arith.constant 0 : index
      %39 = vector.load %arg5[%c0_19, %c0_20] : memref<8x1xf32, #tpu.memory_space<vmem>>, vector<8x1xf32>
      tpu.vector_store %arg5[%c0_19, %c0_20], %38 {strides = array<i32>} : memref<8x1xf32, #tpu.memory_space<vmem>>, vector<8x1xf32>,
      %cst_21 = arith.constant 0.000000e+00 : f32
      %40 = vector.broadcast %cst_21 : f32 to vector<8x1xf32>
      %c0_22 = arith.constant 0 : index
      %c0_23 = arith.constant 0 : index
      %41 = vector.load %arg6[%c0_22, %c0_23] : memref<8x1xf32, #tpu.memory_space<vmem>>, vector<8x1xf32>
      tpu.vector_store %arg6[%c0_22, %c0_23], %40 {strides = array<i32>} : memref<8x1xf32, #tpu.memory_space<vmem>>, vector<8x1xf32>,
    } else {
    }
    %c0 = arith.constant 0 : index
    %c0_1 = arith.constant 0 : index
    %3 = vector.load %arg2[%c0, %c0_1] : memref<8x128xf32, #tpu.memory_space<vmem>>, vector<8x128xf32>
    %4 = arith.truncf %3 : vector<8x128xf32> to vector<8x128xbf16>
    %c0_2 = arith.constant 0 : index
    %c0_3 = arith.constant 0 : index
    %5 = vector.load %arg3[%c0_2, %c0_3] : memref<128x512xbf16, #tpu.memory_space<vmem>>, vector<128x512xbf16>
    %cst = arith.constant dense<0.000000e+00> : vector<8x512xf32>
    %6 = tpu.matmul %4, %5, %cst {dimension_numbers = #tpu.dot_dimension_numbers<[1], [0], [0], [1], [0, 0, 1, 1], [], []>} : vector<8x128xbf16>, vector<128x512xbf16>, vector<8x512xf32> -> vector<8x512xf32>
    %c512_i32 = arith.constant 512 : i32
    %7 = arith.muli %arg1, %c512_i32 : i32
    %8 = tpu.iota {dimensions = array<i32: 1>} : vector<8x512xi32>
    %9 = vector.broadcast %7 : i32 to vector<8x512xi32>
    %10 = arith.addi %9, %8 : vector<8x512xi32>
    %c1000_i32 = arith.constant 1000 : i32
    %11 = vector.broadcast %c1000_i32 : i32 to vector<8x512xi32>
    %12 = arith.cmpi slt, %10, %11 : vector<8x512xi32>
    %cst_4 = arith.constant 0xFF800000 : f32
    %13 = vector.broadcast %cst_4 : f32 to vector<8x512xf32>
    %14 = arith.select %12, %6, %13 : vector<8x512xi1>, vector<8x512xf32>
    %c0_5 = arith.constant 0 : index
    %c0_6 = arith.constant 0 : index
    %15 = vector.load %arg5[%c0_5, %c0_6] : memref<8x1xf32, #tpu.memory_space<vmem>>, vector<8x1xf32>
    %cst_7 = arith.constant dense<0xFF800000> : vector<8xf32>
    %16 = vector.multi_reduction <maximumf>, %14, %cst_7 [1] : vector<8x512xf32> to vector<8xf32>
    %17 = vector.shape_cast %16 : vector<8xf32> to vector<8x1xf32>
    %18 = arith.maximumf %15, %17 : vector<8x1xf32>
    %c0_8 = arith.constant 0 : index
    %c0_9 = arith.constant 0 : index
    %19 = vector.load %arg6[%c0_8, %c0_9] : memref<8x1xf32, #tpu.memory_space<vmem>>, vector<8x1xf32>
    %20 = arith.subf %15, %18 : vector<8x1xf32>
    %21 = math.exp %20 : vector<8x1xf32>
    %22 = arith.mulf %19, %21 : vector<8x1xf32>
    %23 = vector.broadcast %18 : vector<8x1xf32> to vector<8x512xf32>
    %24 = arith.subf %14, %23 : vector<8x512xf32>
    %25 = math.exp %24 : vector<8x512xf32>
    %cst_10 = arith.constant dense<0.000000e+00> : vector<8xf32>
    %26 = vector.multi_reduction <add>, %25, %cst_10 [1] : vector<8x512xf32> to vector<8xf32>
    %27 = vector.shape_cast %26 : vector<8xf32> to vector<8x1xf32>
    %28 = arith.addf %22, %27 : vector<8x1xf32>
    %c0_11 = arith.constant 0 : index
    %c0_12 = arith.constant 0 : index
    %29 = vector.load %arg6[%c0_11, %c0_12] : memref<8x1xf32, #tpu.memory_space<vmem>>, vector<8x1xf32>
    tpu.vector_store %arg6[%c0_11, %c0_12], %28 {strides = array<i32>} : memref<8x1xf32, #tpu.memory_space<vmem>>, vector<8x1xf32>,
    %c0_13 = arith.constant 0 : index
    %c0_14 = arith.constant 0 : index
    %30 = vector.load %arg5[%c0_13, %c0_14] : memref<8x1xf32, #tpu.memory_space<vmem>>, vector<8x1xf32>
    tpu.vector_store %arg5[%c0_13, %c0_14], %18 {strides = array<i32>} : memref<8x1xf32, #tpu.memory_space<vmem>>, vector<8x1xf32>,
    %c512_i32_15 = arith.constant 512 : i32
    %31 = arith.muli %arg1, %c512_i32_15 : i32
    %32 = tpu.assume_multiple %31, 512 : i32
    %c0_16 = arith.constant 0 : index
    %33 = arith.index_cast %32 : i32 to index
    %34 = vector.load %arg4[%c0_16, %33] : memref<8x1024xf32, #tpu.memory_space<vmem>>, vector<8x512xf32>
    tpu.vector_store %arg4[%c0_16, %33], %14 {strides = array<i32>} : memref<8x1024xf32, #tpu.memory_space<vmem>>, vector<8x512xf32>,
    %c1_i32 = arith.constant 1 : i32
    %35 = arith.cmpi eq, %arg1, %c1_i32 : i32
    %36 = arith.extui %35 : i1 to i32
    %c0_i32_17 = arith.constant 0 : i32
    %37 = arith.cmpi ne, %36, %c0_i32_17 : i32
    scf.if %37 {
      %c0_18 = arith.constant 0 : index
      %c0_19 = arith.constant 0 : index
      %38 = vector.load %arg5[%c0_18, %c0_19] : memref<8x1xf32, #tpu.memory_space<vmem>>, vector<8x1xf32>
      %c0_20 = arith.constant 0 : index
      %c0_21 = arith.constant 0 : index
      %39 = vector.load %arg6[%c0_20, %c0_21] : memref<8x1xf32, #tpu.memory_space<vmem>>, vector<8x1xf32>
      %40 = math.log %39 : vector<8x1xf32>
      %41 = arith.addf %38, %40 : vector<8x1xf32>
      %c0_22 = arith.constant 0 : index
      %c0_23 = arith.constant 0 : index
      %42 = vector.load %arg4[%c0_22, %c0_23] : memref<8x1024xf32, #tpu.memory_space<vmem>>, vector<8x1024xf32>
      %43 = vector.broadcast %41 : vector<8x1xf32> to vector<8x1024xf32>
      %44 = arith.subf %42, %43 : vector<8x1024xf32>
      %c0_24 = arith.constant 0 : index
      %c0_25 = arith.constant 0 : index
      %45 = vector.load %arg4[%c0_24, %c0_25] : memref<8x1024xf32, #tpu.memory_space<vmem>>, vector<8x1024xf32>
      tpu.vector_store %arg4[%c0_24, %c0_25], %44 {strides = array<i32>} : memref<8x1024xf32, #tpu.memory_space<vmem>>, vector<8x1024xf32>,
    } else {
    }
    return
  }
  func.func @transform_0(%arg0: i32, %arg1: i32) -> (i32, i32) {
    %c0_i32 = arith.constant 0 : i32
    %c0_i32_0 = arith.constant 0 : i32
    return %arg0, %c0_i32 : i32, i32
  }
  func.func @transform_1(%arg0: i32, %arg1: i32) -> (i32, i32) {
    %c0_i32 = arith.constant 0 : i32
    %c0_i32_0 = arith.constant 0 : i32
    return %c0_i32, %arg1 : i32, i32
  }
  func.func @transform_2(%arg0: i32, %arg1: i32) -> (i32, i32) {
    %c0_i32 = arith.constant 0 : i32
    %c0_i32_0 = arith.constant 0 : i32
    return %arg0, %c0_i32 : i32, i32
  }
}

</mosaic_0001>

<llo_original>
// kernel: generator_forward.1
$region0: #{generator_forward.1}
  #allocation0 [shape = 'u32[]', space=smem, size = 0x4, offset = 0x4, fixed_abs, tag = 'smem constant byte address 0x4 - core index']
  #allocation1 [shape = 'u32[72,128]{1,0:T(1,128)}', space=vmem, size = 0x9000, scoped, tag = 'internal scratch']
  #allocation2 [shape = 'f32[8,1]{1,0:T(8,128)}', space=vmem, size = 0x1000, scoped, tag = 'scratch operand']
  #allocation3 [shape = 'f32[8,1]{1,0:T(8,128)}', space=vmem, size = 0x1000, scoped, tag = 'scratch operand']
  %s0 = inlined_call_operand.vmem [shape: f32[16,128], index: 0, kind: input, shape index: {}]
  %s1 = inlined_call_operand.vmem [shape: bf16[128,1000], index: 1, kind: input, shape index: {}]
  %s2 = inlined_call_operand.vmem [shape: f32[16,1024], index: 2, kind: output, shape index: {}]
  %s3 = sld [smem:[#allocation0]]
  $region72: #{generator_forward.1} parent=0
    _
  %s5 = ssub.s32 1, %s3
  %s6 = scalar_select 0, %s5, %s3
  $region1: #{generator_forward.1} parent=0
    #allocation4 [shape = 'u8[262144]{0}', space=vmem, size = 0x40000, scoped, tag = 'input window, operand 1']
    loop: start=0, step=1, limit=6
    $region2: #{generator_forward.1} parent=1 // loop_pre_header
      _
    $region3: #{generator_forward.1} parent=1 // loop_header
      %s8 = sphi 0, %s12
      %p9 = scmp.ge.s32.totalorder %s8, 6
      %s15 = sphi 0, %s27
      %s16 = sphi 0, %s23
      %s17 = sphi 0, %s15
      %s18 = sphi 0, %s16
      %s19 = sphi 0, %s17
      %s20 = sphi 0, %s18
      %s30 = sphi 0, %s32
      %s33 = sphi 0, %s30
      %s34 = sphi 0, %s33
      %s50 = sphi 0, %s34
      %s56 = sphi 0, %s58
      %s59 = sphi 0, %s56
      %s60 = sphi 0, %s59
      %s76 = sphi 0, %s60
      %s82 = sphi 0, %s84
      %s85 = sphi 0, %s82
      %s86 = sphi 0, %s85
      %s102 = sphi 0, %s86
    $region4: #{generator_forward.1} parent=1 // loop_header_branch
      %11 = sbr.rel (%p9) target = $region8
    $region5: #{generator_forward.1} parent=1 // loop_body
      %s13 = ssub.s32 %s8, 1
      %s14 = ssub.s32 %s8, 2
      %s21 = sadd.s32 1, %s16
      %p22 = scmp.ge.s32.totalorder %s21, 2
      %s23 = scalar_select %p22, 0, %s21
      %s24 = sadd.s32 1, %s15
      %s25 = scalar_select %p22, %s24, %s15
      %p26 = scmp.ge.s32.totalorder %s25, 2
      %s27 = scalar_select %p26, 0, %s25
      %s28 = ssub.s32 %s15, %s27
      %p29 = scmp.eq.s32.totalorder %s28, 0
      %s31 = sadd.s32 %s30, 1
      %s32 = scalar_select %p29, %s30, %s31
      %p35 = pneg %p29
      %p36 = scmp.eq.s32.totalorder %s8, 3
      %p37 = por %p35, %p36
      %p38 = scmp.ne.s32.totalorder %s30, %s33
      %p39 = scmp.eq.s32.totalorder %s8, 0
      %p40 = por %p38, %p39
      %p41 = scmp.ne.s32.totalorder %s30, %s33
      %p42 = scmp.eq.s32.totalorder %s13, 3
      %p43 = por %p41, %p42
      %p44 = scmp.ne.s32.totalorder %s33, %s34
      %p45 = scmp.eq.s32.totalorder %s13, 0
      %p46 = por %p44, %p45
      %p47 = scmp.ne.s32.totalorder %s33, %s34
      %p48 = scmp.eq.s32.totalorder %s14, 3
      %p49 = por %p47, %p48
      %p51 = scmp.ne.s32.totalorder %s34, %s50
      %p52 = scmp.eq.s32.totalorder %s14, 0
      %p53 = por %p51, %p52
      %s54 = ssub.s32 %s16, %s23
      %p55 = scmp.eq.s32.totalorder %s54, 0
      %s57 = sadd.s32 %s56, 1
      %s58 = scalar_select %p55, %s56, %s57
      %p61 = pneg %p55
      %p62 = scmp.eq.s32.totalorder %s8, 3
      %p63 = por %p61, %p62
      %p64 = scmp.ne.s32.totalorder %s56, %s59
      %p65 = scmp.eq.s32.totalorder %s8, 0
      %p66 = por %p64, %p65
      %p67 = scmp.ne.s32.totalorder %s56, %s59
      %p68 = scmp.eq.s32.totalorder %s13, 3
      %p69 = por %p67, %p68
      %p70 = scmp.ne.s32.totalorder %s59, %s60
      %p71 = scmp.eq.s32.totalorder %s13, 0
      %p72 = por %p70, %p71
      %p73 = scmp.ne.s32.totalorder %s59, %s60
      %p74 = scmp.eq.s32.totalorder %s14, 3
      %p75 = por %p73, %p74
      %p77 = scmp.ne.s32.totalorder %s60, %s76
      %p78 = scmp.eq.s32.totalorder %s14, 0
      %p79 = por %p77, %p78
      %s80 = ssub.s32 %s15, %s27
      %p81 = scmp.eq.s32.totalorder %s80, 0
      %s83 = sadd.s32 %s82, 1
      %s84 = scalar_select %p81, %s82, %s83
      %p87 = pneg %p81
      %p88 = scmp.eq.s32.totalorder %s8, 3
      %p89 = por %p87, %p88
      %p90 = scmp.ne.s32.totalorder %s82, %s85
      %p91 = scmp.eq.s32.totalorder %s8, 0
      %p92 = por %p90, %p91
      %p93 = scmp.ne.s32.totalorder %s82, %s85
      %p94 = scmp.eq.s32.totalorder %s13, 3
      %p95 = por %p93, %p94
      %p96 = scmp.ne.s32.totalorder %s85, %s86
      %p97 = scmp.eq.s32.totalorder %s13, 0
      %p98 = por %p96, %p97
      %p99 = scmp.ne.s32.totalorder %s85, %s86
      %p100 = scmp.eq.s32.totalorder %s14, 3
      %p101 = por %p99, %p100
      %p103 = scmp.ne.s32.totalorder %s86, %s102
      %p104 = scmp.eq.s32.totalorder %s14, 0
      %p105 = por %p103, %p104
      %p106 = scmp.le.s32.totalorder 1, %s8
      %p107 = scmp.lt.s32.totalorder %s8, 5
      %p108 = pnand %p106, %p107
      %p109 = pneg %p108
      // Predicated region
      $region9: #{generator_forward.1} parent=5 // pred_check
        _
      $region10: #{generator_forward.1} parent=5 // pred_check_branch
        %111 = sbr.rel (%p108) target = $region12
      $region11: #{generator_forward.1} parent=5 // pred_region
        %s112 = ssub.s32 %s8, 1
      $region12: #{generator_forward.1} parent=5 // pred_fallthru
        _
      %p113 = scmp.lt.s32.totalorder %s8, 4
      // Predicated region
      $region13: #{generator_forward.1} parent=5 // pred_check
        %p114 = pneg %p113
      $region14: #{generator_forward.1} parent=5 // pred_check_branch
        %116 = sbr.rel (%p114) target = $region16
      $region15: #{generator_forward.1} parent=5 // pred_region
        // Predicated region
        $region17: #{generator_forward.1} parent=15 // pred_check
          %p117 = pneg %p40
        $region18: #{generator_forward.1} parent=15 // pred_check_branch
          %119 = sbr.rel (%p117) target = $region20
        $region19: #{generator_forward.1} parent=15 // pred_region
          %p120 = scmp.lt.s32.totalorder %s15, 1
          %s121 = scalar_select %p120, %s15, 1
          %s122 = smul.addr %s121, 8
          %s123 = scalar_lea.vmem %s0, %s122
        $region20: #{generator_forward.1} parent=15 // pred_fallthru
          _
        // Predicated region
        $region21: #{generator_forward.1} parent=15 // pred_check
          %p124 = pneg %p66
        $region22: #{generator_forward.1} parent=15 // pred_check_branch
          %126 = sbr.rel (%p124) target = $region24
        $region23: #{generator_forward.1} parent=15 // pred_region
          %s127 = sand.u32 %s56, 1
          %s128 = sand.u32 %s56, 1
          %s129 = smul.addr %s128, 256
          %s130 = scalar_lea.vmem [#allocation4], %s129
          %s131 = smul.u32 4, %s16
          %s132 = smul.addr %s131, 4
          %s133 = scalar_lea.vmem %s1, %s132
          // Predicated region
          $region25: #{generator_forward.1} parent=23 // pred_check
            _
          $region26: #{generator_forward.1} parent=23 // pred_check_branch
            %135 = sbr.rel (0) target = $region28
          $region27: #{generator_forward.1} parent=23 // pred_region
            // Predicated region
            $region29: #{generator_forward.1} parent=27 // pred_check
              _
            $region30: #{generator_forward.1} parent=27 // pred_check_branch
              %137 = sbr.rel (0) target = $region32
            $region31: #{generator_forward.1} parent=27 // pred_region
              loop: start=0, step=1, limit=1
              $region33: #{generator_forward.1} parent=31 // loop_pre_header
                _
              $region34: #{generator_forward.1} parent=31 // loop_header
                %s139 = sphi 0, %s143
                %p140 = scmp.ge.s32.totalorder %s139, 1
                %s144 = sphi %s133, %s133
                %s145 = sphi %s130, %s130
              $region35: #{generator_forward.1} parent=31 // loop_header_branch
                %142 = sbr.rel (%p140) target = $region39
              $region36: #{generator_forward.1} parent=31 // loop_body
                %v146 = vld [vmem:[%s144] sm:$0xff]
                %147 = vst [vmem:[%s145] sm:$0xff] %v146
                %v148 = vld [vmem:[%s144 + $0x8] sm:$0xff]
                %149 = vst [vmem:[%s145 + $0x8] sm:$0xff] %v148
                %v150 = vld [vmem:[%s144 + $0x20] sm:$0xff]
                %151 = vst [vmem:[%s145 + $0x10] sm:$0xff] %v150
                %v152 = vld [vmem:[%s144 + $0x28] sm:$0xff]
                %153 = vst [vmem:[%s145 + $0x18] sm:$0xff] %v152
                %v154 = vld [vmem:[%s144 + $0x40] sm:$0xff]
                %155 = vst [vmem:[%s145 + $0x20] sm:$0xff] %v154
                %v156 = vld [vmem:[%s144 + $0x48] sm:$0xff]
                %157 = vst [vmem:[%s145 + $0x28] sm:$0xff] %v156
                %v158 = vld [vmem:[%s144 + $0x60] sm:$0xff]
                %159 = vst [vmem:[%s145 + $0x30] sm:$0xff] %v158
                %v160 = vld [vmem:[%s144 + $0x68] sm:$0xff]
                %161 = vst [vmem:[%s145 + $0x38] sm:$0xff] %v160
                %v162 = vld [vmem:[%s144 + $0x80] sm:$0xff]
                %163 = vst [vmem:[%s145 + $0x40] sm:$0xff] %v162
                %v164 = vld [vmem:[%s144 + $0x88] sm:$0xff]
                %165 = vst [vmem:[%s145 + $0x48] sm:$0xff] %v164
                %v166 = vld [vmem:[%s144 + $0xa0] sm:$0xff]
                %167 = vst [vmem:[%s145 + $0x50] sm:$0xff] %v166
                %v168 = vld [vmem:[%s144 + $0xa8] sm:$0xff]
                %169 = vst [vmem:[%s145 + $0x58] sm:$0xff] %v168
                %v170 = vld [vmem:[%s144 + $0xc0] sm:$0xff]
                %171 = vst [vmem:[%s145 + $0x60] sm:$0xff] %v170
                %v172 = vld [vmem:[%s144 + $0xc8] sm:$0xff]
                %173 = vst [vmem:[%s145 + $0x68] sm:$0xff] %v172
                %v174 = vld [vmem:[%s144 + $0xe0] sm:$0xff]
                %175 = vst [vmem:[%s145 + $0x70] sm:$0xff] %v174
                %v176 = vld [vmem:[%s144 + $0xe8] sm:$0xff]
                %177 = vst [vmem:[%s145 + $0x78] sm:$0xff] %v176
                %v178 = vld [vmem:[%s144 + $0x100] sm:$0xff]
                %179 = vst [vmem:[%s145 + $0x80] sm:$0xff] %v178
                %v180 = vld [vmem:[%s144 + $0x108] sm:$0xff]
                %181 = vst [vmem:[%s145 + $0x88] sm:$0xff] %v180
                %v182 = vld [vmem:[%s144 + $0x120] sm:$0xff]
                %183 = vst [vmem:[%s145 + $0x90] sm:$0xff] %v182
                %v184 = vld [vmem:[%s144 + $0x128] sm:$0xff]
                %185 = vst [vmem:[%s145 + $0x98] sm:$0xff] %v184
                %v186 = vld [vmem:[%s144 + $0x140] sm:$0xff]
                %187 = vst [vmem:[%s145 + $0xa0] sm:$0xff] %v186
                %v188 = vld [vmem:[%s144 + $0x148] sm:$0xff]
                %189 = vst [vmem:[%s145 + $0xa8] sm:$0xff] %v188
                %v190 = vld [vmem:[%s144 + $0x160] sm:$0xff]
                %191 = vst [vmem:[%s145 + $0xb0] sm:$0xff] %v190
                %v192 = vld [vmem:[%s144 + $0x168] sm:$0xff]
                %193 = vst [vmem:[%s145 + $0xb8] sm:$0xff] %v192
                %v194 = vld [vmem:[%s144 + $0x180] sm:$0xff]
                %195 = vst [vmem:[%s145 + $0xc0] sm:$0xff] %v194
                %v196 = vld [vmem:[%s144 + $0x188] sm:$0xff]
                %197 = vst [vmem:[%s145 + $0xc8] sm:$0xff] %v196
                %v198 = vld [vmem:[%s144 + $0x1a0] sm:$0xff]
                %199 = vst [vmem:[%s145 + $0xd0] sm:$0xff] %v198
                %v200 = vld [vmem:[%s144 + $0x1a8] sm:$0xff]
                %201 = vst [vmem:[%s145 + $0xd8] sm:$0xff] %v200
                %v202 = vld [vmem:[%s144 + $0x1c0] sm:$0xff]
                %203 = vst [vmem:[%s145 + $0xe0] sm:$0xff] %v202
                %v204 = vld [vmem:[%s144 + $0x1c8] sm:$0xff]
                %205 = vst [vmem:[%s145 + $0xe8] sm:$0xff] %v204
                %v206 = vld [vmem:[%s144 + $0x1e0] sm:$0xff]
                %207 = vst [vmem:[%s145 + $0xf0] sm:$0xff] %v206
                %v208 = vld [vmem:[%s144 + $0x1e8] sm:$0xff]
                %209 = vst [vmem:[%s145 + $0xf8] sm:$0xff] %v208
              $region37: #{generator_forward.1} parent=31 // loop_footer
                %s143 = sadd.s32 1, %s139
              $region38: #{generator_forward.1} parent=31 // loop_footer_branch
                %138 = sbr.rel target = $region34
              $region39: #{generator_forward.1} parent=31 // loop_exit
                _
            $region32: #{generator_forward.1} parent=27 // pred_fallthru
              _
            // Predicated region
            $region40: #{generator_forward.1} parent=27 // pred_check
              _
            $region41: #{generator_forward.1} parent=27 // pred_check_branch
              %211 = sbr.rel target = $region43
            $region42: #{generator_forward.1} parent=27 // pred_region
              _
            $region43: #{generator_forward.1} parent=27 // pred_fallthru
              _
          $region28: #{generator_forward.1} parent=23 // pred_fallthru
            _
          %212 = vnop
        $region24: #{generator_forward.1} parent=15 // pred_fallthru
          _
      $region16: #{generator_forward.1} parent=5 // pred_fallthru
        _
      %p213 = scmp.le.s32.totalorder 1, %s8
      %p214 = scmp.lt.s32.totalorder %s8, 5
      %p215 = pnand %p213, %p214
      %p216 = pneg %p215
      // Predicated region
      $region44: #{generator_forward.1} parent=5 // pred_check
        _
      $region45: #{generator_forward.1} parent=5 // pred_check_branch
        %218 = sbr.rel (%p215) target = $region47
      $region46: #{generator_forward.1} parent=5 // pred_region
        %s219 = ssub.s32 %s8, 1
        %s220 = sand.u32 %s59, 1
        %s221 = sand.u32 %s59, 1
        %s222 = smul.addr %s221, 256
        %s223 = scalar_lea.vmem [#allocation4], %s222
        // Predicated region
        $region48: #{generator_forward.1} parent=46 // pred_check
          %p224 = pneg %p72
        $region49: #{generator_forward.1} parent=46 // pred_check_branch
          %226 = sbr.rel (%p224) target = $region51
        $region50: #{generator_forward.1} parent=46 // pred_region
          _
        $region51: #{generator_forward.1} parent=46 // pred_fallthru
          _
        %p227 = scmp.lt.s32.totalorder %s17, 1
        %s228 = scalar_select %p227, %s17, 1
        %s229 = smul.addr %s228, 8
        %s230 = scalar_lea.vmem %s0, %s229
        %p231 = pneg %p46
        %p232 = pneg %p43
        %s233 = sand.u32 %s59, 1
        %s234 = sand.u32 %s59, 1
        %s235 = smul.addr %s234, 256
        %s236 = scalar_lea.vmem [#allocation4], %s235
        %p237 = pneg %p72
        %p238 = pneg %p69
        %p239 = pneg %p98
        %p240 = pneg %p95
        %p241 = scmp.lt.s32.totalorder %s17, 1
        %s242 = scalar_select %p241, %s17, 1
        %s243 = smul.addr %s242, 8
        %s244 = smul.addr %s243, 8
        %s245 = scalar_lea.vmem %s2, %s244
        %p246 = scmp.lt.s32.totalorder %s17, 1
        %s247 = scalar_select %p246, %s17, 1
        %s248 = smul.addr %s247, 8
        %s249 = scalar_lea.vmem %s0, %s248
        %s250 = smul.u32 4, %s18
        %p251 = scmp.lt.s32.totalorder %s17, 1
        %s252 = scalar_select %p251, %s17, 1
        %s253 = smul.addr %s252, 8
        %s254 = smul.addr %s253, 8
        %s255 = scalar_lea.vmem %s2, %s254
        %p256 = scmp.eq.s32.totalorder %s18, 0
        // Predicated region
        $region52: #{generator_forward.1} parent=46 // pred_check
          %p257 = pneg %p256
        $region53: #{generator_forward.1} parent=46 // pred_check_branch
          %259 = sbr.rel (%p257) target = $region55
        $region54: #{generator_forward.1} parent=46 // pred_region
          %vm260 = vcmask 7168
          %261 = vst.msk [vmem:[#allocation2] sm:$0xff] %vm260, -inf
          %262 = vst.msk [vmem:[#allocation3] sm:$0xff] %vm260, 0.0
        $region55: #{generator_forward.1} parent=46 // pred_fallthru
          _
        %v263 = vld [vmem:[%s249] sm:$0xff]
        %v264 = vpack.c.bf16 %v263, %v263
        %v265 = vld [vmem:[%s223] sm:$0xff]
        %v266 = vld [vmem:[%s223 + $0x8] sm:$0xff]
        %v267 = vld [vmem:[%s223 + $0x10] sm:$0xff]
        %v268 = vld [vmem:[%s223 + $0x18] sm:$0xff]
        %v269 = vld [vmem:[%s223 + $0x20] sm:$0xff]
        %v270 = vld [vmem:[%s223 + $0x28] sm:$0xff]
        %v271 = vld [vmem:[%s223 + $0x30] sm:$0xff]
        %v272 = vld [vmem:[%s223 + $0x38] sm:$0xff]
        %v273 = vld [vmem:[%s223 + $0x40] sm:$0xff]
        %v274 = vld [vmem:[%s223 + $0x48] sm:$0xff]
        %v275 = vld [vmem:[%s223 + $0x50] sm:$0xff]
        %v276 = vld [vmem:[%s223 + $0x58] sm:$0xff]
        %v277 = vld [vmem:[%s223 + $0x60] sm:$0xff]
        %v278 = vld [vmem:[%s223 + $0x68] sm:$0xff]
        %v279 = vld [vmem:[%s223 + $0x70] sm:$0xff]
        %v280 = vld [vmem:[%s223 + $0x78] sm:$0xff]
        %v281 = vld [vmem:[%s223 + $0x80] sm:$0xff]
        %v282 = vld [vmem:[%s223 + $0x88] sm:$0xff]
        %v283 = vld [vmem:[%s223 + $0x90] sm:$0xff]
        %v284 = vld [vmem:[%s223 + $0x98] sm:$0xff]
        %v285 = vld [vmem:[%s223 + $0xa0] sm:$0xff]
        %v286 = vld [vmem:[%s223 + $0xa8] sm:$0xff]
        %v287 = vld [vmem:[%s223 + $0xb0] sm:$0xff]
        %v288 = vld [vmem:[%s223 + $0xb8] sm:$0xff]
        %v289 = vld [vmem:[%s223 + $0xc0] sm:$0xff]
        %v290 = vld [vmem:[%s223 + $0xc8] sm:$0xff]
        %v291 = vld [vmem:[%s223 + $0xd0] sm:$0xff]
        %v292 = vld [vmem:[%s223 + $0xd8] sm:$0xff]
        %v293 = vld [vmem:[%s223 + $0xe0] sm:$0xff]
        %v294 = vld [vmem:[%s223 + $0xe8] sm:$0xff]
        %v295 = vld [vmem:[%s223 + $0xf0] sm:$0xff]
        %v296 = vld [vmem:[%s223 + $0xf8] sm:$0xff]
        %v329 = vunpack.c.l.b16 %v265
        %v330 = vunpack.c.h.b16 %v265
        %v331 = vunpack.c.l.b16 %v266
        %v332 = vunpack.c.h.b16 %v266
        %v333 = vunpack.c.l.b16 %v267
        %v334 = vunpack.c.h.b16 %v267
        %v335 = vunpack.c.l.b16 %v268
        %v336 = vunpack.c.h.b16 %v268
        %v337 = vunpack.c.l.b16 %v269
        %v338 = vunpack.c.h.b16 %v269
        %v339 = vunpack.c.l.b16 %v270
        %v340 = vunpack.c.h.b16 %v270
        %v341 = vunpack.c.l.b16 %v271
        %v342 = vunpack.c.h.b16 %v271
        %v343 = vunpack.c.l.b16 %v272
        %v344 = vunpack.c.h.b16 %v272
        %v345 = vunpack.c.l.b16 %v273
        %v346 = vunpack.c.h.b16 %v273
        %v347 = vunpack.c.l.b16 %v274
        %v348 = vunpack.c.h.b16 %v274
        %v349 = vunpack.c.l.b16 %v275
        %v350 = vunpack.c.h.b16 %v275
        %v351 = vunpack.c.l.b16 %v276
        %v352 = vunpack.c.h.b16 %v276
        %v353 = vunpack.c.l.b16 %v277
        %v354 = vunpack.c.h.b16 %v277
        %v355 = vunpack.c.l.b16 %v278
        %v356 = vunpack.c.h.b16 %v278
        %v357 = vunpack.c.l.b16 %v279
        %v358 = vunpack.c.h.b16 %v279
        %v359 = vunpack.c.l.b16 %v280
        %v360 = vunpack.c.h.b16 %v280
        %v361 = vunpack.c.l.b16 %v281
        %v362 = vunpack.c.h.b16 %v281
        %v363 = vunpack.c.l.b16 %v282
        %v364 = vunpack.c.h.b16 %v282
        %v365 = vunpack.c.l.b16 %v283
        %v366 = vunpack.c.h.b16 %v283
        %v367 = vunpack.c.l.b16 %v284
        %v368 = vunpack.c.h.b16 %v284
        %v369 = vunpack.c.l.b16 %v285
        %v370 = vunpack.c.h.b16 %v285
        %v371 = vunpack.c.l.b16 %v286
        %v372 = vunpack.c.h.b16 %v286
        %v373 = vunpack.c.l.b16 %v287
        %v374 = vunpack.c.h.b16 %v287
        %v375 = vunpack.c.l.b16 %v288
        %v376 = vunpack.c.h.b16 %v288
        %v377 = vunpack.c.l.b16 %v289
        %v378 = vunpack.c.h.b16 %v289
        %v379 = vunpack.c.l.b16 %v290
        %v380 = vunpack.c.h.b16 %v290
        %v381 = vunpack.c.l.b16 %v291
        %v382 = vunpack.c.h.b16 %v291
        %v383 = vunpack.c.l.b16 %v292
        %v384 = vunpack.c.h.b16 %v292
        %v385 = vunpack.c.l.b16 %v293
        %v386 = vunpack.c.h.b16 %v293
        %v387 = vunpack.c.l.b16 %v294
        %v388 = vunpack.c.h.b16 %v294
        %v389 = vunpack.c.l.b16 %v295
        %v390 = vunpack.c.h.b16 %v295
        %v391 = vunpack.c.l.b16 %v296
        %v392 = vunpack.c.h.b16 %v296
        %v393 = vpack.c.b16 %v333, %v329
        %v394 = vpack.c.b16 %v334, %v330
        %v395 = vpack.c.b16 %v335, %v331
        %v396 = vpack.c.b16 %v336, %v332
        %v397 = vpack.c.b16 %v341, %v337
        %v398 = vpack.c.b16 %v342, %v338
        %v399 = vpack.c.b16 %v343, %v339
        %v400 = vpack.c.b16 %v344, %v340
        %v401 = vpack.c.b16 %v349, %v345
        %v402 = vpack.c.b16 %v350, %v346
        %v403 = vpack.c.b16 %v351, %v347
        %v404 = vpack.c.b16 %v352, %v348
        %v405 = vpack.c.b16 %v357, %v353
        %v406 = vpack.c.b16 %v358, %v354
        %v407 = vpack.c.b16 %v359, %v355
        %v408 = vpack.c.b16 %v360, %v356
        %v409 = vpack.c.b16 %v365, %v361
        %v410 = vpack.c.b16 %v366, %v362
        %v411 = vpack.c.b16 %v367, %v363
        %v412 = vpack.c.b16 %v368, %v364
        %v413 = vpack.c.b16 %v373, %v369
        %v414 = vpack.c.b16 %v374, %v370
        %v415 = vpack.c.b16 %v375, %v371
        %v416 = vpack.c.b16 %v376, %v372
        %v417 = vpack.c.b16 %v381, %v377
        %v418 = vpack.c.b16 %v382, %v378
        %v419 = vpack.c.b16 %v383, %v379
        %v420 = vpack.c.b16 %v384, %v380
        %v421 = vpack.c.b16 %v389, %v385
        %v422 = vpack.c.b16 %v390, %v386
        %v423 = vpack.c.b16 %v391, %v387
        %v424 = vpack.c.b16 %v392, %v388
        %457 = vmatpush.bf16.msra.mxu0 %v421
        %458 = vmatpush.bf16.msra.mxu0 %v417
        %459 = vmatpush.bf16.msra.mxu0 %v413
        %460 = vmatpush.bf16.msra.mxu0 %v409
        %461 = vmatpush.bf16.msra.mxu0 %v405
        %462 = vmatpush.bf16.msra.mxu0 %v401
        %463 = vmatpush.bf16.msra.mxu0 %v397
        %464 = vmatpush.bf16.msra.mxu0 %v393
        %465 = vmatmul.bf16.gmra.mxu0 %v264
        %v466 = vpop.f32.mrf.mxu0
        %v467 = vadd.f32 0.0, %v466
        %v468 = vpop.f32.mrf.mxu0
        %469 = vdwg.mxu0
        %470 = vmatpush.bf16.msra.mxu0 %v422
        %471 = vmatpush.bf16.msra.mxu0 %v418
        %472 = vmatpush.bf16.msra.mxu0 %v414
        %473 = vmatpush.bf16.msra.mxu0 %v410
        %474 = vmatpush.bf16.msra.mxu0 %v406
        %475 = vmatpush.bf16.msra.mxu0 %v402
        %476 = vmatpush.bf16.msra.mxu0 %v398
        %477 = vmatpush.bf16.msra.mxu0 %v394
        %478 = vmatmul.bf16.gmra.mxu0 %v264
        %v479 = vpop.f32.mrf.mxu0
        %v480 = vadd.f32 0.0, %v479
        %v481 = vpop.f32.mrf.mxu0
        %482 = vdwg.mxu0
        %483 = vmatpush.bf16.msra.mxu0 %v423
        %484 = vmatpush.bf16.msra.mxu0 %v419
        %485 = vmatpush.bf16.msra.mxu0 %v415
        %486 = vmatpush.bf16.msra.mxu0 %v411
        %487 = vmatpush.bf16.msra.mxu0 %v407
        %488 = vmatpush.bf16.msra.mxu0 %v403
        %489 = vmatpush.bf16.msra.mxu0 %v399
        %490 = vmatpush.bf16.msra.mxu0 %v395
        %491 = vmatmul.bf16.gmra.mxu0 %v264
        %v492 = vpop.f32.mrf.mxu0
        %v493 = vadd.f32 0.0, %v492
        %v494 = vpop.f32.mrf.mxu0
        %495 = vdwg.mxu0
        %496 = vmatpush.bf16.msra.mxu0 %v424
        %497 = vmatpush.bf16.msra.mxu0 %v420
        %498 = vmatpush.bf16.msra.mxu0 %v416
        %499 = vmatpush.bf16.msra.mxu0 %v412
        %500 = vmatpush.bf16.msra.mxu0 %v408
        %501 = vmatpush.bf16.msra.mxu0 %v404
        %502 = vmatpush.bf16.msra.mxu0 %v400
        %503 = vmatpush.bf16.msra.mxu0 %v396
        %504 = vmatmul.bf16.gmra.mxu0 %v264
        %v505 = vpop.f32.mrf.mxu0
        %v506 = vadd.f32 0.0, %v505
        %v507 = vpop.f32.mrf.mxu0
        %508 = vdwg.mxu0
        %s509 = smul.u32 %s18, 512
        %v510 = vlaneseq
        %v511 = vand.u32 %v510, 127
        %v512 = vadd.s32 %v511, 128
        %v513 = vadd.s32 %v511, 256
        %v514 = vadd.s32 %v511, 384
        %v515 = vstv %s509
        %v516 = vadd.s32 %v515, %v511
        %v517 = vadd.s32 %v515, %v512
        %v518 = vadd.s32 %v515, %v513
        %v519 = vadd.s32 %v515, %v514
        %vm520 = vcmp.lt.s32.totalorder %v516, 1000
        %vm521 = vcmp.lt.s32.totalorder %v517, 1000
        %vm522 = vcmp.lt.s32.totalorder %v518, 1000
        %vm523 = vcmp.lt.s32.totalorder %v519, 1000
        %v524 = vsel %vm520, %v467, -inf
        %v525 = vsel %vm521, %v480, -inf
        %v526 = vsel %vm522, %v493, -inf
        %v527 = vsel %vm523, %v506, -inf
        %v528 = vld [vmem:[#allocation2] sm:$0xff]
        %v529 = vmax.f32 %v524, %v525
        %v530 = vmax.f32 %v526, %v527
        %v531 = vmax.f32 %v529, %v530
        %532 = vmax.xlane.f32.xlu0 %v531
        %v533 = vpop.xlane.xlu0 %532
        %v534 = vmax.f32 %v528, %v533
        %v535 = vld [vmem:[#allocation3] sm:$0xff]
        %v536 = vsub.f32 %v528, %v534
        %v537 = vmul.f32 %v536, 1.442695
        %v538 = vpow.pop %v537
        %v539 = vmul.f32 %v535, %v538
        %541 = vset.pattern.permute.xlu0 0
        %542 = vperm.xlu0 %541, %v534
        %v543 = vpop.permute.xlu0 %542
        %v545 = vsub.f32 %v524, %v543
        %v546 = vsub.f32 %v525, %v543
        %v547 = vsub.f32 %v526, %v543
        %v548 = vsub.f32 %v527, %v543
        %v549 = vmul.f32 %v545, 1.442695
        %v550 = vpow.pop %v549
        %v551 = vmul.f32 %v546, 1.442695
        %v552 = vpow.pop %v551
        %v553 = vmul.f32 %v547, 1.442695
        %v554 = vpow.pop %v553
        %v555 = vmul.f32 %v548, 1.442695
        %v556 = vpow.pop %v555
        %v557 = vadd.f32 %v550, %v552
        %v558 = vadd.f32 %v557, %v554
        %v559 = vadd.f32 %v558, %v556
        %560 = vadd.xlane.f32.xlu0 %v559
        %v561 = vpop.xlane.xlu0 %560
        %v562 = vadd.f32 %v539, %v561
        %vm563 = vcmask 7168
        %564 = vst.msk [vmem:[#allocation3] sm:$0xff] %vm563, %v562
        %565 = vst.msk [vmem:[#allocation2] sm:$0xff] %vm563, %v534
        %s566 = sshra.s32 %s509, 7
        %s567 = sand.u32 %s509, 127
        %s568 = smul.addr %s566, 8
        %s569 = scalar_lea.vmem %s255, %s568
        %570 = vst [vmem:[%s569] sm:$0xff] %v524
        %571 = vst [vmem:[%s569 + $0x8] sm:$0xff] %v525
        %572 = vst [vmem:[%s569 + $0x10] sm:$0xff] %v526
        %573 = vst [vmem:[%s569 + $0x18] sm:$0xff] %v527
        %p574 = scmp.eq.s32.totalorder %s18, 1
        // Predicated region
        $region56: #{generator_forward.1} parent=46 // pred_check
          %p575 = pneg %p574
        $region57: #{generator_forward.1} parent=46 // pred_check_branch
          %577 = sbr.rel (%p575) target = $region59
        $region58: #{generator_forward.1} parent=46 // pred_region
          %v578 = vld [vmem:[#allocation2] sm:$0xff]
          %v579 = vld [vmem:[#allocation3] sm:$0xff]
          %v580 = vlog2.pop %v579
          %v581 = vmul.f32 %v580, 0.6931472
          %v582 = vadd.f32 %v578, %v581
          %v583 = vld [vmem:[%s255] sm:$0xff]
          %v584 = vld [vmem:[%s255 + $0x8] sm:$0xff]
          %v585 = vld [vmem:[%s255 + $0x10] sm:$0xff]
          %v586 = vld [vmem:[%s255 + $0x18] sm:$0xff]
          %v587 = vld [vmem:[%s255 + $0x20] sm:$0xff]
          %v588 = vld [vmem:[%s255 + $0x28] sm:$0xff]
          %v589 = vld [vmem:[%s255 + $0x30] sm:$0xff]
          %v590 = vld [vmem:[%s255 + $0x38] sm:$0xff]
          %592 = vset.pattern.permute.xlu0 0
          %593 = vperm.xlu0 %592, %v582
          %v594 = vpop.permute.xlu0 %593
          %v596 = vsub.f32 %v583, %v594
          %v597 = vsub.f32 %v584, %v594
          %v598 = vsub.f32 %v585, %v594
          %v599 = vsub.f32 %v586, %v594
          %v600 = vsub.f32 %v587, %v594
          %v601 = vsub.f32 %v588, %v594
          %v602 = vsub.f32 %v589, %v594
          %v603 = vsub.f32 %v590, %v594
          %604 = vst [vmem:[%s255] sm:$0xff] %v596
          %605 = vst [vmem:[%s255 + $0x8] sm:$0xff] %v597
          %606 = vst [vmem:[%s255 + $0x10] sm:$0xff] %v598
          %607 = vst [vmem:[%s255 + $0x18] sm:$0xff] %v599
          %608 = vst [vmem:[%s255 + $0x20] sm:$0xff] %v600
          %609 = vst [vmem:[%s255 + $0x28] sm:$0xff] %v601
          %610 = vst [vmem:[%s255 + $0x30] sm:$0xff] %v602
          %611 = vst [vmem:[%s255 + $0x38] sm:$0xff] %v603
        $region59: #{generator_forward.1} parent=46 // pred_fallthru
          _
        %p612 = scmp.lt.s32.totalorder %s17, 1
        %s613 = scalar_select %p612, %s17, 1
        %s614 = smul.addr %s613, 8
        %s615 = smul.addr %s614, 8
        %s616 = scalar_lea.vmem %s2, %s615
        // Predicated region
        $region60: #{generator_forward.1} parent=46 // pred_check
          %p617 = pneg %p95
        $region61: #{generator_forward.1} parent=46 // pred_check_branch
          %619 = sbr.rel (%p617) target = $region63
        $region62: #{generator_forward.1} parent=46 // pred_region
          _
        $region63: #{generator_forward.1} parent=46 // pred_fallthru
          _
      $region47: #{generator_forward.1} parent=5 // pred_fallthru
        _
      %p620 = scmp.le.s32.totalorder 2, %s8
      // Predicated region
      $region64: #{generator_forward.1} parent=5 // pred_check
        %p621 = pneg %p620
      $region65: #{generator_forward.1} parent=5 // pred_check_branch
        %623 = sbr.rel (%p621) target = $region67
      $region66: #{generator_forward.1} parent=5 // pred_region
        %s624 = ssub.s32 %s8, 2
        // Predicated region
        $region68: #{generator_forward.1} parent=66 // pred_check
          %p625 = pneg %p101
        $region69: #{generator_forward.1} parent=66 // pred_check_branch
          %627 = sbr.rel (%p625) target = $region71
        $region70: #{generator_forward.1} parent=66 // pred_region
          %p628 = scmp.lt.s32.totalorder %s19, 1
          %s629 = scalar_select %p628, %s19, 1
          %s630 = smul.addr %s629, 8
          %s631 = smul.addr %s630, 8
          %s632 = scalar_lea.vmem %s2, %s631
        $region71: #{generator_forward.1} parent=66 // pred_fallthru
          _
      $region67: #{generator_forward.1} parent=5 // pred_fallthru
        _
    $region6: #{generator_forward.1} parent=1 // loop_footer
      %s12 = sadd.s32 1, %s8
    $region7: #{generator_forward.1} parent=1 // loop_footer_branch
      %7 = sbr.rel target = $region3
    $region8: #{generator_forward.1} parent=1 // loop_exit
      _

</llo_original>
